<compile_context>
chip_gen: v5e
topology: v5e:2x2
jax: 0.10.0
libtpu: 0.0.40
codegen_flags: <defaults>
</compile_context>

<pallas_src>
from functools import partial

import jax
import jax.numpy as jnp
from jax import lax
from jax.experimental import pallas as pl
from jax.experimental.pallas import tpu as pltpu

BN_EPS = 1e-5
_VMEM = pl.BlockSpec(memory_space=pltpu.MemorySpace.VMEM)

# Model-layout constants (hidden_dims=[64,128], encoder out 64+64, LSTM H=32).
D_IN_PAD = 64      # padded sig(6)+ref(51) input lanes
D_H1 = 128         # encoder layer-1 width (64 sig | 64 ref)
D_H2 = 256         # encoder layer-2 width (128 sig | 128 ref)
D_FEAT = 128       # encoder output lanes (64 sig | 64 ref) = LSTM input
HID = 32           # LSTM hidden size
OUT_PAD = 128      # padded FC output lanes


# ------------------------------ fused kernel ---------------------------------
def fused_forward_kernel(x_ref, w_ref, w2_ref, vec_ref, o_ref):
    # ---- static slices of the packed parameter slabs (sublane aligned) ----
    w1 = w_ref[0:D_IN_PAD, :]                          # (64, 128)  encoder L1
    w3 = w_ref[D_IN_PAD:D_IN_PAD + D_H2, :]            # (256, 128) encoder L3
    off = D_IN_PAD + D_H2
    wih = w_ref[off:off + D_FEAT, :]                   # (128, 128) W_ih [i,f,o,g]
    off += D_FEAT
    whh = w_ref[off:off + HID, :]                      # (32, 128)  W_hh [i,f,o,g]
    off += HID
    wfc = w_ref[off:off + HID, :]                      # (32, 128)  FC (padded)
    w2 = w2_ref[...]                                   # (128, 256) encoder L2

    b2 = vec_ref[0:1, :]                               # (1, 256)
    g2 = vec_ref[1:2, :]
    be2 = vec_ref[2:3, :]
    b1 = vec_ref[3:4, 0:128]
    g1 = vec_ref[3:4, 128:256]
    be1 = vec_ref[4:5, 0:128]
    b3 = vec_ref[4:5, 128:256]
    bg = vec_ref[5:6, 0:128]                           # LSTM bias (b_ih+b_hh)
    bfc = vec_ref[5:6, 128:256]                        # FC bias (padded)

    x = x_ref[...]                                     # (N*B, 64) time-major
    inv_rows = 1.0 / x.shape[0]

    def bn(h, gamma, beta):
        # One-pass batch norm: the two row reductions are independent.
        s1 = jnp.sum(h, axis=0, keepdims=True)
        s2 = jnp.sum(h * h, axis=0, keepdims=True)
        mu = s1 * inv_rows
        var = s2 * inv_rows - mu * mu
        return (h - mu) * lax.rsqrt(var + BN_EPS) * gamma + beta

    # Fused block-diagonal encoders (sig in cols 0:64 / 0:128, ref in cols
    # 64:128 / 128:256 -- disjoint columns, so BN stats match two separate
    # encoders exactly).
    h = jnp.dot(x, w1, preferred_element_type=jnp.float32) + b1
    h = bn(jnp.maximum(h, 0.0), g1, be1)
    h = jnp.dot(h, w2, preferred_element_type=jnp.float32) + b2
    h = bn(jnp.maximum(h, 0.0), g2, be2)
    feats = jnp.dot(h, w3, preferred_element_type=jnp.float32) + b3  # (N*B,128)

    # Hoisted LSTM input projection over all timesteps: one MXU call.
    xw = jnp.dot(feats, wih, preferred_element_type=jnp.float32) + bg

    B = o_ref.shape[0]
    H = whh.shape[0]
    N = xw.shape[0] // B

    # Pre-materialize the per-step row slices: they do not depend on h/c so
    # they stay off the serial recurrence chain.
    x_steps = [xw[t * B:(t + 1) * B, :] for t in range(N)]

    h_t = jnp.zeros((B, H), jnp.float32)
    c_t = jnp.zeros((B, H), jnp.float32)

    # Fully unrolled recurrence.  Gate columns pre-ordered [i, f, o, g]:
    # one sigmoid over the first 3H lanes, one tanh over the last H lanes.
    for t in range(N):
        gates = x_steps[t] + jnp.dot(h_t, whh,
                                     preferred_element_type=jnp.float32)
        sfo = jax.nn.sigmoid(gates[:, :3 * H])
        g = jnp.tanh(gates[:, 3 * H:])
        i = sfo[:, 0 * H:1 * H]
        f = sfo[:, 1 * H:2 * H]
        o = sfo[:, 2 * H:3 * H]
        c_t = f * c_t + i * g
        h_t = o * jnp.tanh(c_t)

    # Final FC on the last hidden state; 128 padded lanes -> unmasked store.
    o_ref[...] = (jnp.dot(h_t, wfc, preferred_element_type=jnp.float32) + bfc)


# --------------------- one-time parameter packing (hoisted) -------------------
def pack_params(params):
    sw1, sb1, sg1, sbe1, sw2, sb2, sg2, sbe2, sw3, sb3 = params["sig_mlp"]
    rw1, rb1, rg1, rbe1, rw2, rb2, rg2, rbe2, rw3, rb3 = params["ref_mlp"]
    wih, whh, b = params["lstm"]          # PyTorch gate order [i, f, g, o]
    wfc, bfc = params["fc"]
    H = whh.shape[0]
    cs, cr = sw1.shape[0], rw1.shape[0]   # 6, 51

    # Block-diagonal encoder weights.
    w1_bd = jnp.zeros((D_IN_PAD, D_H1), jnp.float32)
    w1_bd = w1_bd.at[:cs, :64].set(sw1).at[cs:cs + cr, 64:].set(rw1)
    b1_bd = jnp.concatenate([sb1, rb1], axis=1)
    g1_bd = jnp.concatenate([sg1, rg1], axis=1)
    be1_bd = jnp.concatenate([sbe1, rbe1], axis=1)

    w2_bd = jnp.zeros((D_H1, D_H2), jnp.float32)
    w2_bd = w2_bd.at[:64, :128].set(sw2).at[64:, 128:].set(rw2)
    b2_bd = jnp.concatenate([sb2, rb2], axis=1)
    g2_bd = jnp.concatenate([sg2, rg2], axis=1)
    be2_bd = jnp.concatenate([sbe2, rbe2], axis=1)

    w3_bd = jnp.zeros((D_H2, D_FEAT), jnp.float32)
    w3_bd = w3_bd.at[:128, :64].set(sw3).at[128:, 64:].set(rw3)
    b3_bd = jnp.concatenate([sb3, rb3], axis=1)

    # LSTM gate reorder [i, f, g, o] -> [i, f, o, g] (one time).
    def reorder(w):
        return jnp.concatenate(
            [w[:, :2 * H], w[:, 3 * H:], w[:, 2 * H:3 * H]], axis=1)
    wih_r, whh_r, b_r = reorder(wih), reorder(whh), reorder(b)

    # Final FC padded to 128 lanes.
    out_dim = wfc.shape[1]
    wfc_p = jnp.zeros((H, OUT_PAD), jnp.float32).at[:, :out_dim].set(wfc)
    bfc_p = jnp.zeros((1, OUT_PAD), jnp.float32).at[:, :out_dim].set(bfc)

    # Pack into 3 arrays.
    w_slab = jnp.concatenate([w1_bd, w3_bd, wih_r, whh_r, wfc_p], axis=0)
    vec_slab = jnp.zeros((8, D_H2), jnp.float32)
    vec_slab = vec_slab.at[0:1, :].set(b2_bd)
    vec_slab = vec_slab.at[1:2, :].set(g2_bd)
    vec_slab = vec_slab.at[2:3, :].set(be2_bd)
    vec_slab = vec_slab.at[3:4, :].set(jnp.concatenate([b1_bd, g1_bd], axis=1))
    vec_slab = vec_slab.at[4:5, :].set(jnp.concatenate([be1_bd, b3_bd], axis=1))
    vec_slab = vec_slab.at[5:6, :].set(jnp.concatenate([b_r, bfc_p], axis=1))
    return w_slab, w2_bd, vec_slab


# ------------------------------ forward wrapper -------------------------------
@partial(jax.jit, static_argnames=("out_dim",))
def lstm_model_forward(x, ref, w_slab, w2_bd, vec_slab, out_dim):
    B, N, cs = x.shape
    cr = ref.shape[-1]
    # Time-major flatten (rows t*B + b): each timestep's batch rows are a
    # contiguous sublane slice of the hoisted projection inside the kernel.
    xs = jnp.transpose(x, (1, 0, 2)).reshape(N * B, cs)
    xr = jnp.transpose(ref, (1, 0, 2)).reshape(N * B, cr)
    pad = jnp.zeros((N * B, D_IN_PAD - cs - cr), jnp.float32)
    x_comb = jnp.concatenate([xs, xr, pad], axis=-1)

    out = pl.pallas_call(
        fused_forward_kernel,
        out_shape=jax.ShapeDtypeStruct((B, OUT_PAD), jnp.float32),
        in_specs=[_VMEM] * 4,
        out_specs=_VMEM,
    )(x_comb, w_slab, w2_bd, vec_slab)
    return out[:, :out_dim]


# ------------------------------- parameter setup ------------------------------
def make_mlp_params(key, in_dim, hidden_dims=(64, 128), out_dim=64, scale=0.1):
    dims = (in_dim,) + tuple(hidden_dims) + (out_dim,)
    ks = jax.random.split(key, 4 * (len(dims) - 1))
    p = []
    for i in range(len(dims) - 1):
        kw, kb, kg, kbe = ks[4 * i:4 * i + 4]
        w = scale * jax.random.normal(kw, (dims[i], dims[i + 1]), jnp.float32)
        b = scale * jax.random.normal(kb, (1, dims[i + 1]), jnp.float32)
        p += [w, b]
        if i < len(dims) - 2:  # BN only on hidden layers
            g = 1.0 + scale * jax.random.normal(kg, (1, dims[i + 1]), jnp.float32)
            be = scale * jax.random.normal(kbe, (1, dims[i + 1]), jnp.float32)
            p += [g, be]
    return tuple(p)


def make_lstm_fc_params(key, input_size, hidden_size, output_size, scale=0.1):
    k1, k2, k3, k4, k5 = jax.random.split(key, 5)
    wih = scale * jax.random.normal(k1, (input_size, 4 * hidden_size), jnp.float32)
    whh = scale * jax.random.normal(k2, (hidden_size, 4 * hidden_size), jnp.float32)
    b = scale * jax.random.normal(k3, (1, 4 * hidden_size), jnp.float32)  # b_ih+b_hh
    wfc = scale * jax.random.normal(k4, (hidden_size, output_size), jnp.float32)
    bfc = scale * jax.random.normal(k5, (1, output_size), jnp.float32)
    return (wih, whh, b), (wfc, bfc)


# -------------------------------- pure-JAX reference --------------------------
def _mlp_ref(x2d, p):
    w1, b1, g1, be1, w2, b2, g2, be2, w3, b3 = p
    h = jnp.maximum(x2d @ w1 + b1, 0.0)
    mu = h.mean(0, keepdims=True); var = ((h - mu) ** 2).mean(0, keepdims=True)
    h = (h - mu) / jnp.sqrt(var + BN_EPS) * g1 + be1
    h = jnp.maximum(h @ w2 + b2, 0.0)
    mu = h.mean(0, keepdims=True); var = ((h - mu) ** 2).mean(0, keepdims=True)
    h = (h - mu) / jnp.sqrt(var + BN_EPS) * g2 + be2
    return h @ w3 + b3


def _forward_ref(x, ref, params):
    B, N, _ = x.shape
    sig = _mlp_ref(x.reshape(B * N, -1), params["sig_mlp"]).reshape(B, N, -1)
    rf = _mlp_ref(ref.reshape(B * N, -1), params["ref_mlp"]).reshape(B, N, -1)
    feats = jnp.concatenate([sig, rf], axis=-1)
    wih, whh, b = params["lstm"]
    wfc, bfc = params["fc"]
    H = whh.shape[0]
    h = jnp.zeros((B, H), jnp.float32)
    c = jnp.zeros((B, H), jnp.float32)
    for t in range(N):
        gates = feats[:, t, :] @ wih + h @ whh + b
        i = jax.nn.sigmoid(gates[:, 0 * H:1 * H])
        f = jax.nn.sigmoid(gates[:, 1 * H:2 * H])
        g = jnp.tanh(gates[:, 2 * H:3 * H])
        o = jax.nn.sigmoid(gates[:, 3 * H:4 * H])
        c = f * c + i * g
        h = o * jnp.tanh(c)
    return h @ wfc + bfc


# ------------------------------------ main ------------------------------------
if __name__ == "__main__":
    key = jax.random.PRNGKey(0)
    B, N = 2, 8
    sig_in, ref_in = 6, 51
    hidden_size, output_size = 32, 10
    lstm_input_size = 64 + 64  # concat of the two encoder outputs

    k_sig, k_ref, k_lstm, k_x, k_r = jax.random.split(key, 5)
    params = {
        "sig_mlp": make_mlp_params(k_sig, sig_in),
        "ref_mlp": make_mlp_params(k_ref, ref_in),
    }
    params["lstm"], params["fc"] = make_lstm_fc_params(
        k_lstm, lstm_input_size, hidden_size, output_size)

    # One-time packing (block-diagonal encoders, gate reorder, FC pad).
    w_slab, w2_bd, vec_slab = pack_params(params)

    x = jax.random.normal(k_x, (B, N, sig_in), jnp.float32)
    ref = jax.random.normal(k_r, (B, N, ref_in), jnp.float32)

    out = jax.block_until_ready(
        lstm_model_forward(x, ref, w_slab, w2_bd, vec_slab, out_dim=output_size))
    ref_out = jax.block_until_ready(_forward_ref(x, ref, params))

    assert out.shape == (B, output_size)
    assert jnp.allclose(out, ref_out, rtol=1e-3, atol=1e-3), (
        f"mismatch: max abs err {jnp.max(jnp.abs(out - ref_out))}")
    print("KERNEL_OK")
</pallas_src>

<mosaic_0001>
module attributes {stable_mosaic.version = 11 : i64} {
  func.func @fused_forward_kernel(%arg0: memref<16x64xf32, #tpu.memory_space<vmem>>, %arg1: memref<512x128xf32, #tpu.memory_space<vmem>>, %arg2: memref<128x256xf32, #tpu.memory_space<vmem>>, %arg3: memref<8x256xf32, #tpu.memory_space<vmem>>, %arg4: memref<2x128xf32, #tpu.memory_space<vmem>>) attributes {dimension_semantics = [], scalar_prefetch = 0 : i64, scratch_operands = 0 : i64, tpu.core_type = #tpu.core_type<tc>} {
    %c0 = arith.constant 0 : index
    %c0_0 = arith.constant 0 : index
    %0 = vector.load %arg1[%c0, %c0_0] : memref<512x128xf32, #tpu.memory_space<vmem>>, vector<64x128xf32>
    %c64 = arith.constant 64 : index
    %c0_1 = arith.constant 0 : index
    %1 = vector.load %arg1[%c64, %c0_1] : memref<512x128xf32, #tpu.memory_space<vmem>>, vector<256x128xf32>
    %c320 = arith.constant 320 : index
    %c0_2 = arith.constant 0 : index
    %2 = vector.load %arg1[%c320, %c0_2] : memref<512x128xf32, #tpu.memory_space<vmem>>, vector<128x128xf32>
    %c448 = arith.constant 448 : index
    %c0_3 = arith.constant 0 : index
    %3 = vector.load %arg1[%c448, %c0_3] : memref<512x128xf32, #tpu.memory_space<vmem>>, vector<32x128xf32>
    %c480 = arith.constant 480 : index
    %c0_4 = arith.constant 0 : index
    %4 = vector.load %arg1[%c480, %c0_4] : memref<512x128xf32, #tpu.memory_space<vmem>>, vector<32x128xf32>
    %c0_5 = arith.constant 0 : index
    %c0_6 = arith.constant 0 : index
    %5 = vector.load %arg2[%c0_5, %c0_6] : memref<128x256xf32, #tpu.memory_space<vmem>>, vector<128x256xf32>
    %c0_7 = arith.constant 0 : index
    %c0_8 = arith.constant 0 : index
    %6 = vector.load %arg3[%c0_7, %c0_8] : memref<8x256xf32, #tpu.memory_space<vmem>>, vector<1x256xf32>
    %c1 = arith.constant 1 : index
    %c0_9 = arith.constant 0 : index
    %7 = vector.load %arg3[%c1, %c0_9] : memref<8x256xf32, #tpu.memory_space<vmem>>, vector<1x256xf32>
    %c2 = arith.constant 2 : index
    %c0_10 = arith.constant 0 : index
    %8 = vector.load %arg3[%c2, %c0_10] : memref<8x256xf32, #tpu.memory_space<vmem>>, vector<1x256xf32>
    %c3 = arith.constant 3 : index
    %c0_11 = arith.constant 0 : index
    %9 = vector.load %arg3[%c3, %c0_11] : memref<8x256xf32, #tpu.memory_space<vmem>>, vector<1x128xf32>
    %c3_12 = arith.constant 3 : index
    %c128 = arith.constant 128 : index
    %10 = vector.load %arg3[%c3_12, %c128] : memref<8x256xf32, #tpu.memory_space<vmem>>, vector<1x128xf32>
    %c4 = arith.constant 4 : index
    %c0_13 = arith.constant 0 : index
    %11 = vector.load %arg3[%c4, %c0_13] : memref<8x256xf32, #tpu.memory_space<vmem>>, vector<1x128xf32>
    %c4_14 = arith.constant 4 : index
    %c128_15 = arith.constant 128 : index
    %12 = vector.load %arg3[%c4_14, %c128_15] : memref<8x256xf32, #tpu.memory_space<vmem>>, vector<1x128xf32>
    %c5 = arith.constant 5 : index
    %c0_16 = arith.constant 0 : index
    %13 = vector.load %arg3[%c5, %c0_16] : memref<8x256xf32, #tpu.memory_space<vmem>>, vector<1x128xf32>
    %c5_17 = arith.constant 5 : index
    %c128_18 = arith.constant 128 : index
    %14 = vector.load %arg3[%c5_17, %c128_18] : memref<8x256xf32, #tpu.memory_space<vmem>>, vector<1x128xf32>
    %c0_19 = arith.constant 0 : index
    %c0_20 = arith.constant 0 : index
    %15 = vector.load %arg0[%c0_19, %c0_20] : memref<16x64xf32, #tpu.memory_space<vmem>>, vector<16x64xf32>
    %cst = arith.constant dense<0.000000e+00> : vector<16x128xf32>
    %16 = tpu.matmul %15, %0, %cst {dimension_numbers = #tpu.dot_dimension_numbers<[1], [0], [0], [1], [0, 0, 1, 1], [], []>} : vector<16x64xf32>, vector<64x128xf32>, vector<16x128xf32> -> vector<16x128xf32>
    %17 = vector.broadcast %9 : vector<1x128xf32> to vector<16x128xf32>
    %18 = arith.addf %16, %17 : vector<16x128xf32>
    %cst_21 = arith.constant 0.000000e+00 : f32
    %19 = vector.broadcast %cst_21 : f32 to vector<16x128xf32>
    %20 = arith.maximumf %18, %19 : vector<16x128xf32>
    %cst_22 = arith.constant dense<0.000000e+00> : vector<128xf32>
    %21 = vector.multi_reduction <add>, %20, %cst_22 [0] : vector<16x128xf32> to vector<128xf32>
    %22 = vector.shape_cast %21 : vector<128xf32> to vector<1x128xf32>
    %23 = arith.mulf %20, %20 : vector<16x128xf32>
    %cst_23 = arith.constant dense<0.000000e+00> : vector<128xf32>
    %24 = vector.multi_reduction <add>, %23, %cst_23 [0] : vector<16x128xf32> to vector<128xf32>
    %25 = vector.shape_cast %24 : vector<128xf32> to vector<1x128xf32>
    %cst_24 = arith.constant 6.250000e-02 : f32
    %26 = vector.broadcast %cst_24 : f32 to vector<1x128xf32>
    %27 = arith.mulf %22, %26 : vector<1x128xf32>
    %cst_25 = arith.constant 6.250000e-02 : f32
    %28 = vector.broadcast %cst_25 : f32 to vector<1x128xf32>
    %29 = arith.mulf %25, %28 : vector<1x128xf32>
    %30 = arith.mulf %27, %27 : vector<1x128xf32>
    %31 = arith.subf %29, %30 : vector<1x128xf32>
    %32 = vector.broadcast %27 : vector<1x128xf32> to vector<16x128xf32>
    %33 = arith.subf %20, %32 : vector<16x128xf32>
    %cst_26 = arith.constant 9.99999974E-6 : f32
    %34 = vector.broadcast %cst_26 : f32 to vector<1x128xf32>
    %35 = arith.addf %31, %34 : vector<1x128xf32>
    %36 = math.rsqrt %35 : vector<1x128xf32>
    %37 = vector.broadcast %36 : vector<1x128xf32> to vector<16x128xf32>
    %38 = arith.mulf %33, %37 : vector<16x128xf32>
    %39 = vector.broadcast %10 : vector<1x128xf32> to vector<16x128xf32>
    %40 = arith.mulf %38, %39 : vector<16x128xf32>
    %41 = vector.broadcast %11 : vector<1x128xf32> to vector<16x128xf32>
    %42 = arith.addf %40, %41 : vector<16x128xf32>
    %cst_27 = arith.constant dense<0.000000e+00> : vector<16x256xf32>
    %43 = tpu.matmul %42, %5, %cst_27 {dimension_numbers = #tpu.dot_dimension_numbers<[1], [0], [0], [1], [0, 0, 1, 1], [], []>} : vector<16x128xf32>, vector<128x256xf32>, vector<16x256xf32> -> vector<16x256xf32>
    %44 = vector.broadcast %6 : vector<1x256xf32> to vector<16x256xf32>
    %45 = arith.addf %43, %44 : vector<16x256xf32>
    %cst_28 = arith.constant 0.000000e+00 : f32
    %46 = vector.broadcast %cst_28 : f32 to vector<16x256xf32>
    %47 = arith.maximumf %45, %46 : vector<16x256xf32>
    %cst_29 = arith.constant dense<0.000000e+00> : vector<256xf32>
    %48 = vector.multi_reduction <add>, %47, %cst_29 [0] : vector<16x256xf32> to vector<256xf32>
    %49 = vector.shape_cast %48 : vector<256xf32> to vector<1x256xf32>
    %50 = arith.mulf %47, %47 : vector<16x256xf32>
    %cst_30 = arith.constant dense<0.000000e+00> : vector<256xf32>
    %51 = vector.multi_reduction <add>, %50, %cst_30 [0] : vector<16x256xf32> to vector<256xf32>
    %52 = vector.shape_cast %51 : vector<256xf32> to vector<1x256xf32>
    %cst_31 = arith.constant 6.250000e-02 : f32
    %53 = vector.broadcast %cst_31 : f32 to vector<1x256xf32>
    %54 = arith.mulf %49, %53 : vector<1x256xf32>
    %cst_32 = arith.constant 6.250000e-02 : f32
    %55 = vector.broadcast %cst_32 : f32 to vector<1x256xf32>
    %56 = arith.mulf %52, %55 : vector<1x256xf32>
    %57 = arith.mulf %54, %54 : vector<1x256xf32>
    %58 = arith.subf %56, %57 : vector<1x256xf32>
    %59 = vector.broadcast %54 : vector<1x256xf32> to vector<16x256xf32>
    %60 = arith.subf %47, %59 : vector<16x256xf32>
    %cst_33 = arith.constant 9.99999974E-6 : f32
    %61 = vector.broadcast %cst_33 : f32 to vector<1x256xf32>
    %62 = arith.addf %58, %61 : vector<1x256xf32>
    %63 = math.rsqrt %62 : vector<1x256xf32>
    %64 = vector.broadcast %63 : vector<1x256xf32> to vector<16x256xf32>
    %65 = arith.mulf %60, %64 : vector<16x256xf32>
    %66 = vector.broadcast %7 : vector<1x256xf32> to vector<16x256xf32>
    %67 = arith.mulf %65, %66 : vector<16x256xf32>
    %68 = vector.broadcast %8 : vector<1x256xf32> to vector<16x256xf32>
    %69 = arith.addf %67, %68 : vector<16x256xf32>
    %cst_34 = arith.constant dense<0.000000e+00> : vector<16x128xf32>
    %70 = tpu.matmul %69, %1, %cst_34 {dimension_numbers = #tpu.dot_dimension_numbers<[1], [0], [0], [1], [0, 0, 1, 1], [], []>} : vector<16x256xf32>, vector<256x128xf32>, vector<16x128xf32> -> vector<16x128xf32>
    %71 = vector.broadcast %12 : vector<1x128xf32> to vector<16x128xf32>
    %72 = arith.addf %70, %71 : vector<16x128xf32>
    %cst_35 = arith.constant dense<0.000000e+00> : vector<16x128xf32>
    %73 = tpu.matmul %72, %2, %cst_35 {dimension_numbers = #tpu.dot_dimension_numbers<[1], [0], [0], [1], [0, 0, 1, 1], [], []>} : vector<16x128xf32>, vector<128x128xf32>, vector<16x128xf32> -> vector<16x128xf32>
    %74 = vector.broadcast %13 : vector<1x128xf32> to vector<16x128xf32>
    %75 = arith.addf %73, %74 : vector<16x128xf32>
    %76 = vector.extract_strided_slice %75 {offsets = [0, 0], sizes = [2, 128], strides = [1, 1]} : vector<16x128xf32> to vector<2x128xf32>
    %77 = vector.extract_strided_slice %75 {offsets = [2, 0], sizes = [2, 128], strides = [1, 1]} : vector<16x128xf32> to vector<2x128xf32>
    %78 = vector.extract_strided_slice %75 {offsets = [4, 0], sizes = [2, 128], strides = [1, 1]} : vector<16x128xf32> to vector<2x128xf32>
    %79 = vector.extract_strided_slice %75 {offsets = [6, 0], sizes = [2, 128], strides = [1, 1]} : vector<16x128xf32> to vector<2x128xf32>
    %80 = vector.extract_strided_slice %75 {offsets = [8, 0], sizes = [2, 128], strides = [1, 1]} : vector<16x128xf32> to vector<2x128xf32>
    %81 = vector.extract_strided_slice %75 {offsets = [10, 0], sizes = [2, 128], strides = [1, 1]} : vector<16x128xf32> to vector<2x128xf32>
    %82 = vector.extract_strided_slice %75 {offsets = [12, 0], sizes = [2, 128], strides = [1, 1]} : vector<16x128xf32> to vector<2x128xf32>
    %83 = vector.extract_strided_slice %75 {offsets = [14, 0], sizes = [2, 128], strides = [1, 1]} : vector<16x128xf32> to vector<2x128xf32>
    %cst_36 = arith.constant 0.000000e+00 : f32
    %84 = vector.broadcast %cst_36 : f32 to vector<2x32xf32>
    %cst_37 = arith.constant 0.000000e+00 : f32
    %85 = vector.broadcast %cst_37 : f32 to vector<2x32xf32>
    %cst_38 = arith.constant dense<0.000000e+00> : vector<2x128xf32>
    %86 = tpu.matmul %84, %3, %cst_38 {dimension_numbers = #tpu.dot_dimension_numbers<[1], [0], [0], [1], [0, 0, 1, 1], [], []>} : vector<2x32xf32>, vector<32x128xf32>, vector<2x128xf32> -> vector<2x128xf32>
    %87 = arith.addf %76, %86 : vector<2x128xf32>
    %88 = vector.extract_strided_slice %87 {offsets = [0, 0], sizes = [2, 96], strides = [1, 1]} : vector<2x128xf32> to vector<2x96xf32>
    %89 = arith.negf %88 : vector<2x96xf32>
    %90 = math.exp %89 : vector<2x96xf32>
    %cst_39 = arith.constant 1.000000e+00 : f32
    %91 = vector.broadcast %cst_39 : f32 to vector<2x96xf32>
    %92 = arith.addf %91, %90 : vector<2x96xf32>
    %93 = arith.divf %91, %92 : vector<2x96xf32>
    %94 = vector.extract_strided_slice %87 {offsets = [0, 96], sizes = [2, 32], strides = [1, 1]} : vector<2x128xf32> to vector<2x32xf32>
    %95 = math.tanh %94 : vector<2x32xf32>
    %96 = vector.extract_strided_slice %93 {offsets = [0, 0], sizes = [2, 32], strides = [1, 1]} : vector<2x96xf32> to vector<2x32xf32>
    %97 = vector.extract_strided_slice %93 {offsets = [0, 32], sizes = [2, 32], strides = [1, 1]} : vector<2x96xf32> to vector<2x32xf32>
    %98 = vector.extract_strided_slice %93 {offsets = [0, 64], sizes = [2, 32], strides = [1, 1]} : vector<2x96xf32> to vector<2x32xf32>
    %99 = arith.mulf %97, %85 : vector<2x32xf32>
    %100 = arith.mulf %96, %95 : vector<2x32xf32>
    %101 = arith.addf %99, %100 : vector<2x32xf32>
    %102 = math.tanh %101 : vector<2x32xf32>
    %103 = arith.mulf %98, %102 : vector<2x32xf32>
    %cst_40 = arith.constant dense<0.000000e+00> : vector<2x128xf32>
    %104 = tpu.matmul %103, %3, %cst_40 {dimension_numbers = #tpu.dot_dimension_numbers<[1], [0], [0], [1], [0, 0, 1, 1], [], []>} : vector<2x32xf32>, vector<32x128xf32>, vector<2x128xf32> -> vector<2x128xf32>
    %105 = arith.addf %77, %104 : vector<2x128xf32>
    %106 = vector.extract_strided_slice %105 {offsets = [0, 0], sizes = [2, 96], strides = [1, 1]} : vector<2x128xf32> to vector<2x96xf32>
    %107 = arith.negf %106 : vector<2x96xf32>
    %108 = math.exp %107 : vector<2x96xf32>
    %cst_41 = arith.constant 1.000000e+00 : f32
    %109 = vector.broadcast %cst_41 : f32 to vector<2x96xf32>
    %110 = arith.addf %109, %108 : vector<2x96xf32>
    %111 = arith.divf %109, %110 : vector<2x96xf32>
    %112 = vector.extract_strided_slice %105 {offsets = [0, 96], sizes = [2, 32], strides = [1, 1]} : vector<2x128xf32> to vector<2x32xf32>
    %113 = math.tanh %112 : vector<2x32xf32>
    %114 = vector.extract_strided_slice %111 {offsets = [0, 0], sizes = [2, 32], strides = [1, 1]} : vector<2x96xf32> to vector<2x32xf32>
    %115 = vector.extract_strided_slice %111 {offsets = [0, 32], sizes = [2, 32], strides = [1, 1]} : vector<2x96xf32> to vector<2x32xf32>
    %116 = vector.extract_strided_slice %111 {offsets = [0, 64], sizes = [2, 32], strides = [1, 1]} : vector<2x96xf32> to vector<2x32xf32>
    %117 = arith.mulf %115, %101 : vector<2x32xf32>
    %118 = arith.mulf %114, %113 : vector<2x32xf32>
    %119 = arith.addf %117, %118 : vector<2x32xf32>
    %120 = math.tanh %119 : vector<2x32xf32>
    %121 = arith.mulf %116, %120 : vector<2x32xf32>
    %cst_42 = arith.constant dense<0.000000e+00> : vector<2x128xf32>
    %122 = tpu.matmul %121, %3, %cst_42 {dimension_numbers = #tpu.dot_dimension_numbers<[1], [0], [0], [1], [0, 0, 1, 1], [], []>} : vector<2x32xf32>, vector<32x128xf32>, vector<2x128xf32> -> vector<2x128xf32>
    %123 = arith.addf %78, %122 : vector<2x128xf32>
    %124 = vector.extract_strided_slice %123 {offsets = [0, 0], sizes = [2, 96], strides = [1, 1]} : vector<2x128xf32> to vector<2x96xf32>
    %125 = arith.negf %124 : vector<2x96xf32>
    %126 = math.exp %125 : vector<2x96xf32>
    %cst_43 = arith.constant 1.000000e+00 : f32
    %127 = vector.broadcast %cst_43 : f32 to vector<2x96xf32>
    %128 = arith.addf %127, %126 : vector<2x96xf32>
    %129 = arith.divf %127, %128 : vector<2x96xf32>
    %130 = vector.extract_strided_slice %123 {offsets = [0, 96], sizes = [2, 32], strides = [1, 1]} : vector<2x128xf32> to vector<2x32xf32>
    %131 = math.tanh %130 : vector<2x32xf32>
    %132 = vector.extract_strided_slice %129 {offsets = [0, 0], sizes = [2, 32], strides = [1, 1]} : vector<2x96xf32> to vector<2x32xf32>
    %133 = vector.extract_strided_slice %129 {offsets = [0, 32], sizes = [2, 32], strides = [1, 1]} : vector<2x96xf32> to vector<2x32xf32>
    %134 = vector.extract_strided_slice %129 {offsets = [0, 64], sizes = [2, 32], strides = [1, 1]} : vector<2x96xf32> to vector<2x32xf32>
    %135 = arith.mulf %133, %119 : vector<2x32xf32>
    %136 = arith.mulf %132, %131 : vector<2x32xf32>
    %137 = arith.addf %135, %136 : vector<2x32xf32>
    %138 = math.tanh %137 : vector<2x32xf32>
    %139 = arith.mulf %134, %138 : vector<2x32xf32>
    %cst_44 = arith.constant dense<0.000000e+00> : vector<2x128xf32>
    %140 = tpu.matmul %139, %3, %cst_44 {dimension_numbers = #tpu.dot_dimension_numbers<[1], [0], [0], [1], [0, 0, 1, 1], [], []>} : vector<2x32xf32>, vector<32x128xf32>, vector<2x128xf32> -> vector<2x128xf32>
    %141 = arith.addf %79, %140 : vector<2x128xf32>
    %142 = vector.extract_strided_slice %141 {offsets = [0, 0], sizes = [2, 96], strides = [1, 1]} : vector<2x128xf32> to vector<2x96xf32>
    %143 = arith.negf %142 : vector<2x96xf32>
    %144 = math.exp %143 : vector<2x96xf32>
    %cst_45 = arith.constant 1.000000e+00 : f32
    %145 = vector.broadcast %cst_45 : f32 to vector<2x96xf32>
    %146 = arith.addf %145, %144 : vector<2x96xf32>
    %147 = arith.divf %145, %146 : vector<2x96xf32>
    %148 = vector.extract_strided_slice %141 {offsets = [0, 96], sizes = [2, 32], strides = [1, 1]} : vector<2x128xf32> to vector<2x32xf32>
    %149 = math.tanh %148 : vector<2x32xf32>
    %150 = vector.extract_strided_slice %147 {offsets = [0, 0], sizes = [2, 32], strides = [1, 1]} : vector<2x96xf32> to vector<2x32xf32>
    %151 = vector.extract_strided_slice %147 {offsets = [0, 32], sizes = [2, 32], strides = [1, 1]} : vector<2x96xf32> to vector<2x32xf32>
    %152 = vector.extract_strided_slice %147 {offsets = [0, 64], sizes = [2, 32], strides = [1, 1]} : vector<2x96xf32> to vector<2x32xf32>
    %153 = arith.mulf %151, %137 : vector<2x32xf32>
    %154 = arith.mulf %150, %149 : vector<2x32xf32>
    %155 = arith.addf %153, %154 : vector<2x32xf32>
    %156 = math.tanh %155 : vector<2x32xf32>
    %157 = arith.mulf %152, %156 : vector<2x32xf32>
    %cst_46 = arith.constant dense<0.000000e+00> : vector<2x128xf32>
    %158 = tpu.matmul %157, %3, %cst_46 {dimension_numbers = #tpu.dot_dimension_numbers<[1], [0], [0], [1], [0, 0, 1, 1], [], []>} : vector<2x32xf32>, vector<32x128xf32>, vector<2x128xf32> -> vector<2x128xf32>
    %159 = arith.addf %80, %158 : vector<2x128xf32>
    %160 = vector.extract_strided_slice %159 {offsets = [0, 0], sizes = [2, 96], strides = [1, 1]} : vector<2x128xf32> to vector<2x96xf32>
    %161 = arith.negf %160 : vector<2x96xf32>
    %162 = math.exp %161 : vector<2x96xf32>
    %cst_47 = arith.constant 1.000000e+00 : f32
    %163 = vector.broadcast %cst_47 : f32 to vector<2x96xf32>
    %164 = arith.addf %163, %162 : vector<2x96xf32>
    %165 = arith.divf %163, %164 : vector<2x96xf32>
    %166 = vector.extract_strided_slice %159 {offsets = [0, 96], sizes = [2, 32], strides = [1, 1]} : vector<2x128xf32> to vector<2x32xf32>
    %167 = math.tanh %166 : vector<2x32xf32>
    %168 = vector.extract_strided_slice %165 {offsets = [0, 0], sizes = [2, 32], strides = [1, 1]} : vector<2x96xf32> to vector<2x32xf32>
    %169 = vector.extract_strided_slice %165 {offsets = [0, 32], sizes = [2, 32], strides = [1, 1]} : vector<2x96xf32> to vector<2x32xf32>
    %170 = vector.extract_strided_slice %165 {offsets = [0, 64], sizes = [2, 32], strides = [1, 1]} : vector<2x96xf32> to vector<2x32xf32>
    %171 = arith.mulf %169, %155 : vector<2x32xf32>
    %172 = arith.mulf %168, %167 : vector<2x32xf32>
    %173 = arith.addf %171, %172 : vector<2x32xf32>
    %174 = math.tanh %173 : vector<2x32xf32>
    %175 = arith.mulf %170, %174 : vector<2x32xf32>
    %cst_48 = arith.constant dense<0.000000e+00> : vector<2x128xf32>
    %176 = tpu.matmul %175, %3, %cst_48 {dimension_numbers = #tpu.dot_dimension_numbers<[1], [0], [0], [1], [0, 0, 1, 1], [], []>} : vector<2x32xf32>, vector<32x128xf32>, vector<2x128xf32> -> vector<2x128xf32>
    %177 = arith.addf %81, %176 : vector<2x128xf32>
    %178 = vector.extract_strided_slice %177 {offsets = [0, 0], sizes = [2, 96], strides = [1, 1]} : vector<2x128xf32> to vector<2x96xf32>
    %179 = arith.negf %178 : vector<2x96xf32>
    %180 = math.exp %179 : vector<2x96xf32>
    %cst_49 = arith.constant 1.000000e+00 : f32
    %181 = vector.broadcast %cst_49 : f32 to vector<2x96xf32>
    %182 = arith.addf %181, %180 : vector<2x96xf32>
    %183 = arith.divf %181, %182 : vector<2x96xf32>
    %184 = vector.extract_strided_slice %177 {offsets = [0, 96], sizes = [2, 32], strides = [1, 1]} : vector<2x128xf32> to vector<2x32xf32>
    %185 = math.tanh %184 : vector<2x32xf32>
    %186 = vector.extract_strided_slice %183 {offsets = [0, 0], sizes = [2, 32], strides = [1, 1]} : vector<2x96xf32> to vector<2x32xf32>
    %187 = vector.extract_strided_slice %183 {offsets = [0, 32], sizes = [2, 32], strides = [1, 1]} : vector<2x96xf32> to vector<2x32xf32>
    %188 = vector.extract_strided_slice %183 {offsets = [0, 64], sizes = [2, 32], strides = [1, 1]} : vector<2x96xf32> to vector<2x32xf32>
    %189 = arith.mulf %187, %173 : vector<2x32xf32>
    %190 = arith.mulf %186, %185 : vector<2x32xf32>
    %191 = arith.addf %189, %190 : vector<2x32xf32>
    %192 = math.tanh %191 : vector<2x32xf32>
    %193 = arith.mulf %188, %192 : vector<2x32xf32>
    %cst_50 = arith.constant dense<0.000000e+00> : vector<2x128xf32>
    %194 = tpu.matmul %193, %3, %cst_50 {dimension_numbers = #tpu.dot_dimension_numbers<[1], [0], [0], [1], [0, 0, 1, 1], [], []>} : vector<2x32xf32>, vector<32x128xf32>, vector<2x128xf32> -> vector<2x128xf32>
    %195 = arith.addf %82, %194 : vector<2x128xf32>
    %196 = vector.extract_strided_slice %195 {offsets = [0, 0], sizes = [2, 96], strides = [1, 1]} : vector<2x128xf32> to vector<2x96xf32>
    %197 = arith.negf %196 : vector<2x96xf32>
    %198 = math.exp %197 : vector<2x96xf32>
    %cst_51 = arith.constant 1.000000e+00 : f32
    %199 = vector.broadcast %cst_51 : f32 to vector<2x96xf32>
    %200 = arith.addf %199, %198 : vector<2x96xf32>
    %201 = arith.divf %199, %200 : vector<2x96xf32>
    %202 = vector.extract_strided_slice %195 {offsets = [0, 96], sizes = [2, 32], strides = [1, 1]} : vector<2x128xf32> to vector<2x32xf32>
    %203 = math.tanh %202 : vector<2x32xf32>
    %204 = vector.extract_strided_slice %201 {offsets = [0, 0], sizes = [2, 32], strides = [1, 1]} : vector<2x96xf32> to vector<2x32xf32>
    %205 = vector.extract_strided_slice %201 {offsets = [0, 32], sizes = [2, 32], strides = [1, 1]} : vector<2x96xf32> to vector<2x32xf32>
    %206 = vector.extract_strided_slice %201 {offsets = [0, 64], sizes = [2, 32], strides = [1, 1]} : vector<2x96xf32> to vector<2x32xf32>
    %207 = arith.mulf %205, %191 : vector<2x32xf32>
    %208 = arith.mulf %204, %203 : vector<2x32xf32>
    %209 = arith.addf %207, %208 : vector<2x32xf32>
    %210 = math.tanh %209 : vector<2x32xf32>
    %211 = arith.mulf %206, %210 : vector<2x32xf32>
    %cst_52 = arith.constant dense<0.000000e+00> : vector<2x128xf32>
    %212 = tpu.matmul %211, %3, %cst_52 {dimension_numbers = #tpu.dot_dimension_numbers<[1], [0], [0], [1], [0, 0, 1, 1], [], []>} : vector<2x32xf32>, vector<32x128xf32>, vector<2x128xf32> -> vector<2x128xf32>
    %213 = arith.addf %83, %212 : vector<2x128xf32>
    %214 = vector.extract_strided_slice %213 {offsets = [0, 0], sizes = [2, 96], strides = [1, 1]} : vector<2x128xf32> to vector<2x96xf32>
    %215 = arith.negf %214 : vector<2x96xf32>
    %216 = math.exp %215 : vector<2x96xf32>
    %cst_53 = arith.constant 1.000000e+00 : f32
    %217 = vector.broadcast %cst_53 : f32 to vector<2x96xf32>
    %218 = arith.addf %217, %216 : vector<2x96xf32>
    %219 = arith.divf %217, %218 : vector<2x96xf32>
    %220 = vector.extract_strided_slice %213 {offsets = [0, 96], sizes = [2, 32], strides = [1, 1]} : vector<2x128xf32> to vector<2x32xf32>
    %221 = math.tanh %220 : vector<2x32xf32>
    %222 = vector.extract_strided_slice %219 {offsets = [0, 0], sizes = [2, 32], strides = [1, 1]} : vector<2x96xf32> to vector<2x32xf32>
    %223 = vector.extract_strided_slice %219 {offsets = [0, 32], sizes = [2, 32], strides = [1, 1]} : vector<2x96xf32> to vector<2x32xf32>
    %224 = vector.extract_strided_slice %219 {offsets = [0, 64], sizes = [2, 32], strides = [1, 1]} : vector<2x96xf32> to vector<2x32xf32>
    %225 = arith.mulf %223, %209 : vector<2x32xf32>
    %226 = arith.mulf %222, %221 : vector<2x32xf32>
    %227 = arith.addf %225, %226 : vector<2x32xf32>
    %228 = math.tanh %227 : vector<2x32xf32>
    %229 = arith.mulf %224, %228 : vector<2x32xf32>
    %cst_54 = arith.constant dense<0.000000e+00> : vector<2x128xf32>
    %230 = tpu.matmul %229, %4, %cst_54 {dimension_numbers = #tpu.dot_dimension_numbers<[1], [0], [0], [1], [0, 0, 1, 1], [], []>} : vector<2x32xf32>, vector<32x128xf32>, vector<2x128xf32> -> vector<2x128xf32>
    %231 = vector.broadcast %14 : vector<1x128xf32> to vector<2x128xf32>
    %232 = arith.addf %230, %231 : vector<2x128xf32>
    %c0_55 = arith.constant 0 : index
    %c0_56 = arith.constant 0 : index
    %233 = vector.load %arg4[%c0_55, %c0_56] : memref<2x128xf32, #tpu.memory_space<vmem>>, vector<2x128xf32>
    tpu.vector_store %arg4[%c0_55, %c0_56], %232 {strides = array<i32>} : memref<2x128xf32, #tpu.memory_space<vmem>>, vector<2x128xf32>,
    return
  }
}

</mosaic_0001>

<llo_original>
// kernel: lstm_model_forward.1
$region0: #{lstm_model_forward.1}
  #allocation0 [shape = 'u32[]', space=smem, size = 0x4, offset = 0x4, fixed_abs, tag = 'smem constant byte address 0x4 - core index']
  #allocation1 [shape = 'u32[72,128]{1,0:T(1,128)}', space=vmem, size = 0x9000, scoped, tag = 'internal scratch']
  %s0 = inlined_call_operand.vmem [shape: f32[16,64], index: 0, kind: input, shape index: {}]
  %s1 = inlined_call_operand.hbm [shape: f32[512,128], index: 1, kind: input, shape index: {}]
  %s2 = inlined_call_operand.hbm [shape: f32[128,256], index: 2, kind: input, shape index: {}]
  %s3 = inlined_call_operand.vmem [shape: f32[8,256], index: 3, kind: input, shape index: {}]
  %s4 = inlined_call_operand.hbm [shape: f32[2,128], index: 4, kind: output, shape index: {}]
  %s5 = sld [smem:[#allocation0]]
  $region34: #{lstm_model_forward.1} parent=0
    _
  %s7 = ssub.s32 1, %s5
  %s8 = scalar_select 0, %s7, %s5
  $region1: #{lstm_model_forward.1} parent=0
    #allocation2 [shape = 'u8[262144]{0}', space=vmem, size = 0x40000, scoped, tag = 'input window, operand 1, single buffered']
    #allocation3 [shape = 's32[1]{0}', space=sflag, size = 0x4, scoped, tag = 'scoped memory for lstm_model_forward.1']
    #allocation4 [shape = 's32[1]{0}', space=sflag, size = 0x4, scoped, tag = 'scoped memory for lstm_model_forward.1']
    #allocation5 [shape = 'u8[131072]{0}', space=vmem, size = 0x20000, scoped, tag = 'input window, operand 2, single buffered']
    #allocation6 [shape = 's32[1]{0}', space=sflag, size = 0x4, scoped, tag = 'scoped memory for lstm_model_forward.1']
    #allocation7 [shape = 'u8[1024]{0}', space=vmem, size = 0x400, scoped, tag = 'output window, operand 0, single buffered']
    %9 = vsyncpa [#allocation3], 0
    %10 = vsyncpa [#allocation6], 0
    %11 = vsyncpa [#allocation4], 0
    // Predicated region
    $region2: #{lstm_model_forward.1} parent=1 // pred_check
      _
    $region3: #{lstm_model_forward.1} parent=1 // pred_check_branch
      %13 = sbr.rel (0) target = $region5
    $region4: #{lstm_model_forward.1} parent=1 // pred_region
      _
    $region5: #{lstm_model_forward.1} parent=1 // pred_fallthru
      _
    // Predicated region
    $region6: #{lstm_model_forward.1} parent=1 // pred_check
      _
    $region7: #{lstm_model_forward.1} parent=1 // pred_check_branch
      %15 = sbr.rel (0) target = $region9
    $region8: #{lstm_model_forward.1} parent=1 // pred_region
      %17 = vsyncadd [#allocation3], 0
      %s18 = sshll.u32 %s1, 4
      %s19 = int_to_ptr.hbm [resolvable:$true] %s18
      %s20 = sshll.u32 [#allocation2], 4
      %s21 = int_to_ptr.vmem [resolvable:$true] %s20
      %26 = dma.hbm_to_vmem [thread:$0]  %s19, 8192, %s21, [#allocation3], 128, 128, 8
    $region9: #{lstm_model_forward.1} parent=1 // pred_fallthru
      _
    // Predicated region
    $region10: #{lstm_model_forward.1} parent=1 // pred_check
      _
    $region11: #{lstm_model_forward.1} parent=1 // pred_check_branch
      %28 = sbr.rel (0) target = $region13
    $region12: #{lstm_model_forward.1} parent=1 // pred_region
      %30 = vsyncadd [#allocation6], 0
      %s31 = sshll.u32 %s2, 4
      %s32 = int_to_ptr.hbm [resolvable:$true] %s31
      %s33 = sshll.u32 [#allocation5], 4
      %s34 = int_to_ptr.vmem [resolvable:$true] %s33
      %39 = dma.hbm_to_vmem [thread:$0]  %s32, 4096, %s34, [#allocation6], 256, 256, 16
    $region13: #{lstm_model_forward.1} parent=1 // pred_fallthru
      _
    // Predicated region
    $region14: #{lstm_model_forward.1} parent=1 // pred_check
      _
    $region15: #{lstm_model_forward.1} parent=1 // pred_check_branch
      %41 = sbr.rel (0) target = $region17
    $region16: #{lstm_model_forward.1} parent=1 // pred_region
      _
    $region17: #{lstm_model_forward.1} parent=1 // pred_fallthru
      _
    // Predicated region
    $region18: #{lstm_model_forward.1} parent=1 // pred_check
      _
    $region19: #{lstm_model_forward.1} parent=1 // pred_check_branch
      %43 = sbr.rel (0) target = $region21
    $region20: #{lstm_model_forward.1} parent=1 // pred_region
      %45 = dma.done [#allocation3], 8192
    $region21: #{lstm_model_forward.1} parent=1 // pred_fallthru
      _
    // Predicated region
    $region22: #{lstm_model_forward.1} parent=1 // pred_check
      _
    $region23: #{lstm_model_forward.1} parent=1 // pred_check_branch
      %47 = sbr.rel (0) target = $region25
    $region24: #{lstm_model_forward.1} parent=1 // pred_region
      %49 = dma.done [#allocation6], 4096
    $region25: #{lstm_model_forward.1} parent=1 // pred_fallthru
      _
    %v50 = vld [vmem:[#allocation2] sm:$0xff]
    %v51 = vld [vmem:[#allocation2 + $0x8] sm:$0xff]
    %v52 = vld [vmem:[#allocation2 + $0x10] sm:$0xff]
    %v53 = vld [vmem:[#allocation2 + $0x18] sm:$0xff]
    %v54 = vld [vmem:[#allocation2 + $0x20] sm:$0xff]
    %v55 = vld [vmem:[#allocation2 + $0x28] sm:$0xff]
    %v56 = vld [vmem:[#allocation2 + $0x30] sm:$0xff]
    %v57 = vld [vmem:[#allocation2 + $0x38] sm:$0xff]
    %v58 = vld [vmem:[#allocation2 + $0x40] sm:$0xff]
    %v59 = vld [vmem:[#allocation2 + $0x48] sm:$0xff]
    %v60 = vld [vmem:[#allocation2 + $0x50] sm:$0xff]
    %v61 = vld [vmem:[#allocation2 + $0x58] sm:$0xff]
    %v62 = vld [vmem:[#allocation2 + $0x60] sm:$0xff]
    %v63 = vld [vmem:[#allocation2 + $0x68] sm:$0xff]
    %v64 = vld [vmem:[#allocation2 + $0x70] sm:$0xff]
    %v65 = vld [vmem:[#allocation2 + $0x78] sm:$0xff]
    %v66 = vld [vmem:[#allocation2 + $0x80] sm:$0xff]
    %v67 = vld [vmem:[#allocation2 + $0x88] sm:$0xff]
    %v68 = vld [vmem:[#allocation2 + $0x90] sm:$0xff]
    %v69 = vld [vmem:[#allocation2 + $0x98] sm:$0xff]
    %v70 = vld [vmem:[#allocation2 + $0xa0] sm:$0xff]
    %v71 = vld [vmem:[#allocation2 + $0xa8] sm:$0xff]
    %v72 = vld [vmem:[#allocation2 + $0xb0] sm:$0xff]
    %v73 = vld [vmem:[#allocation2 + $0xb8] sm:$0xff]
    %v74 = vld [vmem:[#allocation2 + $0xc0] sm:$0xff]
    %v75 = vld [vmem:[#allocation2 + $0xc8] sm:$0xff]
    %v76 = vld [vmem:[#allocation2 + $0xd0] sm:$0xff]
    %v77 = vld [vmem:[#allocation2 + $0xd8] sm:$0xff]
    %v78 = vld [vmem:[#allocation2 + $0xe0] sm:$0xff]
    %v79 = vld [vmem:[#allocation2 + $0xe8] sm:$0xff]
    %v80 = vld [vmem:[#allocation2 + $0xf0] sm:$0xff]
    %v81 = vld [vmem:[#allocation2 + $0xf8] sm:$0xff]
    %v82 = vld [vmem:[#allocation2 + $0x100] sm:$0xff]
    %v83 = vld [vmem:[#allocation2 + $0x108] sm:$0xff]
    %v84 = vld [vmem:[#allocation2 + $0x110] sm:$0xff]
    %v85 = vld [vmem:[#allocation2 + $0x118] sm:$0xff]
    %v86 = vld [vmem:[#allocation2 + $0x120] sm:$0xff]
    %v87 = vld [vmem:[#allocation2 + $0x128] sm:$0xff]
    %v88 = vld [vmem:[#allocation2 + $0x130] sm:$0xff]
    %v89 = vld [vmem:[#allocation2 + $0x138] sm:$0xff]
    %v90 = vld [vmem:[#allocation2 + $0x140] sm:$0xff]
    %v91 = vld [vmem:[#allocation2 + $0x148] sm:$0xff]
    %v92 = vld [vmem:[#allocation2 + $0x150] sm:$0xff]
    %v93 = vld [vmem:[#allocation2 + $0x158] sm:$0xff]
    %v94 = vld [vmem:[#allocation2 + $0x160] sm:$0xff]
    %v95 = vld [vmem:[#allocation2 + $0x168] sm:$0xff]
    %v96 = vld [vmem:[#allocation2 + $0x170] sm:$0xff]
    %v97 = vld [vmem:[#allocation2 + $0x178] sm:$0xff]
    %v98 = vld [vmem:[#allocation2 + $0x180] sm:$0xff]
    %v99 = vld [vmem:[#allocation2 + $0x188] sm:$0xff]
    %v100 = vld [vmem:[#allocation2 + $0x190] sm:$0xff]
    %v101 = vld [vmem:[#allocation2 + $0x198] sm:$0xff]
    %v102 = vld [vmem:[#allocation2 + $0x1a0] sm:$0xff]
    %v103 = vld [vmem:[#allocation2 + $0x1a8] sm:$0xff]
    %v104 = vld [vmem:[#allocation2 + $0x1b0] sm:$0xff]
    %v105 = vld [vmem:[#allocation2 + $0x1b8] sm:$0xff]
    %v106 = vld [vmem:[#allocation2 + $0x1c0] sm:$0xff]
    %v107 = vld [vmem:[#allocation2 + $0x1c8] sm:$0xff]
    %v108 = vld [vmem:[#allocation2 + $0x1d0] sm:$0xff]
    %v109 = vld [vmem:[#allocation2 + $0x1d8] sm:$0xff]
    %v110 = vld [vmem:[#allocation2 + $0x1e0] sm:$0xff]
    %v111 = vld [vmem:[#allocation2 + $0x1e8] sm:$0xff]
    %v112 = vld [vmem:[#allocation2 + $0x1f0] sm:$0xff]
    %v113 = vld [vmem:[#allocation2 + $0x1f8] sm:$0xff]
    %v114 = vld [vmem:[#allocation5] sm:$0xff]
    %v115 = vld [vmem:[#allocation5 + $0x8] sm:$0xff]
    %v116 = vld [vmem:[#allocation5 + $0x10] sm:$0xff]
    %v117 = vld [vmem:[#allocation5 + $0x18] sm:$0xff]
    %v118 = vld [vmem:[#allocation5 + $0x20] sm:$0xff]
    %v119 = vld [vmem:[#allocation5 + $0x28] sm:$0xff]
    %v120 = vld [vmem:[#allocation5 + $0x30] sm:$0xff]
    %v121 = vld [vmem:[#allocation5 + $0x38] sm:$0xff]
    %v122 = vld [vmem:[#allocation5 + $0x40] sm:$0xff]
    %v123 = vld [vmem:[#allocation5 + $0x48] sm:$0xff]
    %v124 = vld [vmem:[#allocation5 + $0x50] sm:$0xff]
    %v125 = vld [vmem:[#allocation5 + $0x58] sm:$0xff]
    %v126 = vld [vmem:[#allocation5 + $0x60] sm:$0xff]
    %v127 = vld [vmem:[#allocation5 + $0x68] sm:$0xff]
    %v128 = vld [vmem:[#allocation5 + $0x70] sm:$0xff]
    %v129 = vld [vmem:[#allocation5 + $0x78] sm:$0xff]
    %v130 = vld [vmem:[#allocation5 + $0x80] sm:$0xff]
    %v131 = vld [vmem:[#allocation5 + $0x88] sm:$0xff]
    %v132 = vld [vmem:[#allocation5 + $0x90] sm:$0xff]
    %v133 = vld [vmem:[#allocation5 + $0x98] sm:$0xff]
    %v134 = vld [vmem:[#allocation5 + $0xa0] sm:$0xff]
    %v135 = vld [vmem:[#allocation5 + $0xa8] sm:$0xff]
    %v136 = vld [vmem:[#allocation5 + $0xb0] sm:$0xff]
    %v137 = vld [vmem:[#allocation5 + $0xb8] sm:$0xff]
    %v138 = vld [vmem:[#allocation5 + $0xc0] sm:$0xff]
    %v139 = vld [vmem:[#allocation5 + $0xc8] sm:$0xff]
    %v140 = vld [vmem:[#allocation5 + $0xd0] sm:$0xff]
    %v141 = vld [vmem:[#allocation5 + $0xd8] sm:$0xff]
    %v142 = vld [vmem:[#allocation5 + $0xe0] sm:$0xff]
    %v143 = vld [vmem:[#allocation5 + $0xe8] sm:$0xff]
    %v144 = vld [vmem:[#allocation5 + $0xf0] sm:$0xff]
    %v145 = vld [vmem:[#allocation5 + $0xf8] sm:$0xff]
    %v146 = vld [vmem:[%s3] ss:$8 sm:$0x3]
    %s147 = scalar_lea.vmem %s3, 1
    %v148 = vld [vmem:[%s147] ss:$8 sm:$0x3]
    %s149 = scalar_lea.vmem %s3, 2
    %v150 = vld [vmem:[%s149] ss:$8 sm:$0x3]
    %v151 = vld [vmem:[%s3 + $0x3] ss:$0 sm:$0xff]
    %v152 = vld [vmem:[%s3 + $0xb] ss:$0 sm:$0xff]
    %v153 = vld [vmem:[%s3 + $0x4] ss:$0 sm:$0xff]
    %v154 = vld [vmem:[%s3 + $0xc] ss:$0 sm:$0xff]
    %v155 = vld [vmem:[%s3 + $0x5] ss:$0 sm:$0xff]
    %v156 = vld [vmem:[%s3 + $0xd] ss:$0 sm:$0xff]
    %v157 = vld [vmem:[%s0] sm:$0xff]
    %v158 = vld [vmem:[%s0 + $0x8] sm:$0xff]
    %vm159 = vcmask 523264
    %v161 = vsel %vm159, %v157, 0
    %v164 = vsel %vm159, %v158, 0
    %166 = vmatpush.msra.mxu0 0.0
    %167 = vmatpush.msra.mxu0 0.0
    %168 = vmatpush.msra.mxu0 0.0
    %169 = vmatpush.msra.mxu0 0.0
    %170 = vmatpush.msra.mxu0 0.0
    %171 = vmatpush.msra.mxu0 0.0
    %172 = vmatpush.msra.mxu0 0.0
    %173 = vmatpush.msra.mxu0 0.0
    %174 = vmatpush.msra.mxu0 %v57
    %175 = vmatpush.msra.mxu0 %v56
    %176 = vmatpush.msra.mxu0 %v55
    %177 = vmatpush.msra.mxu0 %v54
    %178 = vmatpush.msra.mxu0 %v53
    %179 = vmatpush.msra.mxu0 %v52
    %180 = vmatpush.msra.mxu0 %v51
    %181 = vmatpush.msra.mxu0 %v50
    %182 = vmatmul.f32.gmra.mxu0 %v161
    %v183 = vpop.f32.mrf.mxu0
    %v184 = vadd.f32 %v151, %v183
    %185 = vmatmul.f32.gmra.mxu0 %v164
    %v186 = vpop.f32.mrf.mxu0
    %v187 = vadd.f32 %v151, %v186
    %188 = vdwg.mxu0
    %v189 = vmax.f32 %v184, 0.0
    %v190 = vmax.f32 %v187, 0.0
    %v191 = vadd.f32 %v189, %v190
    %v192 = vrot.slane %v191, 4
    %v193 = vadd.f32 %v191, %v192
    %v194 = vrot.slane %v193, 2
    %v195 = vadd.f32 %v193, %v194
    %v196 = vrot.slane %v195, 1
    %v197 = vadd.f32 %v195, %v196
    %v198 = vmul.f32 %v189, %v189
    %v199 = vmul.f32 %v190, %v190
    %v200 = vadd.f32 %v198, %v199
    %v201 = vrot.slane %v200, 4
    %v202 = vadd.f32 %v200, %v201
    %v203 = vrot.slane %v202, 2
    %v204 = vadd.f32 %v202, %v203
    %v205 = vrot.slane %v204, 1
    %v206 = vadd.f32 %v204, %v205
    %v207 = vmul.f32 %v197, 0.0625
    %v208 = vmul.f32 %v206, 0.0625
    %v209 = vmul.f32 %v207, %v207
    %v210 = vsub.f32 %v208, %v209
    %v211 = vsub.f32 %v189, %v207
    %v212 = vsub.f32 %v190, %v207
    %v213 = vadd.f32 %v210, 1e-05
    %v214 = vrsqrt.pop %v213
    %v215 = vmul.f32 %v214, %v213
    %v216 = vmul.f32 %v215, %v214
    %v217 = vmul.f32 0.5, %v216
    %v218 = vsub.f32 1.5, %v217
    %v219 = vmul.f32 %v214, %v218
    %vm220 = vweird.f32 %v213
    %vm221 = vweird.f32 %v214
    %vm222 = vmor %vm220, %vm221
    %v223 = vsel %vm222, %v214, %v219
    %v224 = vmul.f32 %v211, %v223
    %v225 = vmul.f32 %v212, %v223
    %v226 = vmul.f32 %v224, %v152
    %v227 = vmul.f32 %v225, %v152
    %v228 = vadd.f32 %v226, %v153
    %v229 = vadd.f32 %v227, %v153
    %v231 = vperm.slane %v146, 0
    %v232 = vperm.slane %v146, 1
    %235 = vmatpush.msra.mxu0 %v144
    %236 = vmatpush.msra.mxu0 %v142
    %237 = vmatpush.msra.mxu0 %v140
    %238 = vmatpush.msra.mxu0 %v138
    %239 = vmatpush.msra.mxu0 %v136
    %240 = vmatpush.msra.mxu0 %v134
    %241 = vmatpush.msra.mxu0 %v132
    %242 = vmatpush.msra.mxu0 %v130
    %243 = vmatpush.msra.mxu0 %v128
    %244 = vmatpush.msra.mxu0 %v126
    %245 = vmatpush.msra.mxu0 %v124
    %246 = vmatpush.msra.mxu0 %v122
    %247 = vmatpush.msra.mxu0 %v120
    %248 = vmatpush.msra.mxu0 %v118
    %249 = vmatpush.msra.mxu0 %v116
    %250 = vmatpush.msra.mxu0 %v114
    %251 = vmatmul.f32.gmra.mxu0 %v228
    %v252 = vpop.f32.mrf.mxu0
    %v253 = vadd.f32 %v231, %v252
    %254 = vmatmul.f32.gmra.mxu0 %v229
    %v255 = vpop.f32.mrf.mxu0
    %v256 = vadd.f32 %v231, %v255
    %257 = vdwg.mxu0
    %258 = vmatpush.msra.mxu0 %v145
    %259 = vmatpush.msra.mxu0 %v143
    %260 = vmatpush.msra.mxu0 %v141
    %261 = vmatpush.msra.mxu0 %v139
    %262 = vmatpush.msra.mxu0 %v137
    %263 = vmatpush.msra.mxu0 %v135
    %264 = vmatpush.msra.mxu0 %v133
    %265 = vmatpush.msra.mxu0 %v131
    %266 = vmatpush.msra.mxu0 %v129
    %267 = vmatpush.msra.mxu0 %v127
    %268 = vmatpush.msra.mxu0 %v125
    %269 = vmatpush.msra.mxu0 %v123
    %270 = vmatpush.msra.mxu0 %v121
    %271 = vmatpush.msra.mxu0 %v119
    %272 = vmatpush.msra.mxu0 %v117
    %273 = vmatpush.msra.mxu0 %v115
    %274 = vmatmul.f32.gmra.mxu0 %v228
    %v275 = vpop.f32.mrf.mxu0
    %v276 = vadd.f32 %v232, %v275
    %277 = vmatmul.f32.gmra.mxu0 %v229
    %v278 = vpop.f32.mrf.mxu0
    %v279 = vadd.f32 %v232, %v278
    %280 = vdwg.mxu0
    %v281 = vmax.f32 %v253, 0.0
    %v282 = vmax.f32 %v276, 0.0
    %v283 = vmax.f32 %v256, 0.0
    %v284 = vmax.f32 %v279, 0.0
    %v285 = vadd.f32 %v281, %v283
    %v286 = vrot.slane %v285, 4
    %v287 = vadd.f32 %v285, %v286
    %v288 = vrot.slane %v287, 2
    %v289 = vadd.f32 %v287, %v288
    %v290 = vrot.slane %v289, 1
    %v291 = vadd.f32 %v289, %v290
    %v292 = vadd.f32 %v282, %v284
    %v293 = vrot.slane %v292, 4
    %v294 = vadd.f32 %v292, %v293
    %v295 = vrot.slane %v294, 2
    %v296 = vadd.f32 %v294, %v295
    %v297 = vrot.slane %v296, 1
    %v298 = vadd.f32 %v296, %v297
    %v299 = vmul.f32 %v281, %v281
    %v300 = vmul.f32 %v282, %v282
    %v301 = vmul.f32 %v283, %v283
    %v302 = vmul.f32 %v284, %v284
    %v303 = vadd.f32 %v299, %v301
    %v304 = vrot.slane %v303, 4
    %v305 = vadd.f32 %v303, %v304
    %v306 = vrot.slane %v305, 2
    %v307 = vadd.f32 %v305, %v306
    %v308 = vrot.slane %v307, 1
    %v309 = vadd.f32 %v307, %v308
    %v310 = vadd.f32 %v300, %v302
    %v311 = vrot.slane %v310, 4
    %v312 = vadd.f32 %v310, %v311
    %v313 = vrot.slane %v312, 2
    %v314 = vadd.f32 %v312, %v313
    %v315 = vrot.slane %v314, 1
    %v316 = vadd.f32 %v314, %v315
    %v317 = vmul.f32 %v291, 0.0625
    %v318 = vmul.f32 %v298, 0.0625
    %v319 = vmul.f32 %v309, 0.0625
    %v320 = vmul.f32 %v316, 0.0625
    %v321 = vmul.f32 %v317, %v317
    %v322 = vmul.f32 %v318, %v318
    %v323 = vsub.f32 %v319, %v321
    %v324 = vsub.f32 %v320, %v322
    %v325 = vsub.f32 %v281, %v317
    %v326 = vsub.f32 %v282, %v318
    %v327 = vsub.f32 %v283, %v317
    %v328 = vsub.f32 %v284, %v318
    %v329 = vadd.f32 %v323, 1e-05
    %v330 = vadd.f32 %v324, 1e-05
    %v331 = vrsqrt.pop %v329
    %v332 = vmul.f32 %v331, %v329
    %v333 = vmul.f32 %v332, %v331
    %v334 = vmul.f32 0.5, %v333
    %v335 = vsub.f32 1.5, %v334
    %v336 = vmul.f32 %v331, %v335
    %vm337 = vweird.f32 %v329
    %vm338 = vweird.f32 %v331
    %vm339 = vmor %vm337, %vm338
    %v340 = vsel %vm339, %v331, %v336
    %v341 = vrsqrt.pop %v330
    %v342 = vmul.f32 %v341, %v330
    %v343 = vmul.f32 %v342, %v341
    %v344 = vmul.f32 0.5, %v343
    %v345 = vsub.f32 1.5, %v344
    %v346 = vmul.f32 %v341, %v345
    %vm347 = vweird.f32 %v330
    %vm348 = vweird.f32 %v341
    %vm349 = vmor %vm347, %vm348
    %v350 = vsel %vm349, %v341, %v346
    %v351 = vmul.f32 %v325, %v340
    %v352 = vmul.f32 %v326, %v350
    %v353 = vmul.f32 %v327, %v340
    %v354 = vmul.f32 %v328, %v350
    %v356 = vperm.slane %v148, 0
    %v357 = vperm.slane %v148, 1
    %v360 = vmul.f32 %v351, %v356
    %v361 = vmul.f32 %v352, %v357
    %v362 = vmul.f32 %v353, %v356
    %v363 = vmul.f32 %v354, %v357
    %v365 = vperm.slane %v150, 0
    %v366 = vperm.slane %v150, 1
    %v369 = vadd.f32 %v360, %v365
    %v370 = vadd.f32 %v361, %v366
    %v371 = vadd.f32 %v362, %v365
    %v372 = vadd.f32 %v363, %v366
    %373 = vmatpush.msra.mxu0 %v73
    %374 = vmatpush.msra.mxu0 %v72
    %375 = vmatpush.msra.mxu0 %v71
    %376 = vmatpush.msra.mxu0 %v70
    %377 = vmatpush.msra.mxu0 %v69
    %378 = vmatpush.msra.mxu0 %v68
    %379 = vmatpush.msra.mxu0 %v67
    %380 = vmatpush.msra.mxu0 %v66
    %381 = vmatpush.msra.mxu0 %v65
    %382 = vmatpush.msra.mxu0 %v64
    %383 = vmatpush.msra.mxu0 %v63
    %384 = vmatpush.msra.mxu0 %v62
    %385 = vmatpush.msra.mxu0 %v61
    %386 = vmatpush.msra.mxu0 %v60
    %387 = vmatpush.msra.mxu0 %v59
    %388 = vmatpush.msra.mxu0 %v58
    %389 = vmatmul.f32.gmra.mxu0 %v369
    %v390 = vpop.f32.mrf.mxu0
    %v391 = vadd.f32 %v154, %v390
    %392 = vmatmul.f32.gmra.mxu0 %v371
    %v393 = vpop.f32.mrf.mxu0
    %v394 = vadd.f32 %v154, %v393
    %395 = vdwg.mxu0
    %396 = vmatpush.msra.mxu0 %v89
    %397 = vmatpush.msra.mxu0 %v88
    %398 = vmatpush.msra.mxu0 %v87
    %399 = vmatpush.msra.mxu0 %v86
    %400 = vmatpush.msra.mxu0 %v85
    %401 = vmatpush.msra.mxu0 %v84
    %402 = vmatpush.msra.mxu0 %v83
    %403 = vmatpush.msra.mxu0 %v82
    %404 = vmatpush.msra.mxu0 %v81
    %405 = vmatpush.msra.mxu0 %v80
    %406 = vmatpush.msra.mxu0 %v79
    %407 = vmatpush.msra.mxu0 %v78
    %408 = vmatpush.msra.mxu0 %v77
    %409 = vmatpush.msra.mxu0 %v76
    %410 = vmatpush.msra.mxu0 %v75
    %411 = vmatpush.msra.mxu0 %v74
    %412 = vmatmul.f32.gmra.mxu0 %v370
    %v413 = vpop.f32.mrf.mxu0
    %v414 = vadd.f32 %v391, %v413
    %415 = vmatmul.f32.gmra.mxu0 %v372
    %v416 = vpop.f32.mrf.mxu0
    %v417 = vadd.f32 %v394, %v416
    %418 = vdwg.mxu0
    %419 = vmatpush.msra.mxu0 %v105
    %420 = vmatpush.msra.mxu0 %v104
    %421 = vmatpush.msra.mxu0 %v103
    %422 = vmatpush.msra.mxu0 %v102
    %423 = vmatpush.msra.mxu0 %v101
    %424 = vmatpush.msra.mxu0 %v100
    %425 = vmatpush.msra.mxu0 %v99
    %426 = vmatpush.msra.mxu0 %v98
    %427 = vmatpush.msra.mxu0 %v97
    %428 = vmatpush.msra.mxu0 %v96
    %429 = vmatpush.msra.mxu0 %v95
    %430 = vmatpush.msra.mxu0 %v94
    %431 = vmatpush.msra.mxu0 %v93
    %432 = vmatpush.msra.mxu0 %v92
    %433 = vmatpush.msra.mxu0 %v91
    %434 = vmatpush.msra.mxu0 %v90
    %435 = vmatmul.f32.gmra.mxu0 %v414
    %v436 = vpop.f32.mrf.mxu0
    %v437 = vadd.f32 %v155, %v436
    %438 = vmatmul.f32.gmra.mxu0 %v417
    %v439 = vpop.f32.mrf.mxu0
    %v440 = vadd.f32 %v155, %v439
    %441 = vdwg.mxu0
    %vm442 = vcmask 261120
    %v444 = vsel %vm442, 0.0, 0
    %446 = vmatpush.msra.mxu0 0.0
    %447 = vmatpush.msra.mxu0 0.0
    %448 = vmatpush.msra.mxu0 0.0
    %449 = vmatpush.msra.mxu0 0.0
    %450 = vmatpush.msra.mxu0 0.0
    %451 = vmatpush.msra.mxu0 0.0
    %452 = vmatpush.msra.mxu0 0.0
    %453 = vmatpush.msra.mxu0 0.0
    %454 = vmatpush.msra.mxu0 0.0
    %455 = vmatpush.msra.mxu0 0.0
    %456 = vmatpush.msra.mxu0 0.0
    %457 = vmatpush.msra.mxu0 0.0
    %458 = vmatpush.msra.mxu0 %v109
    %459 = vmatpush.msra.mxu0 %v108
    %460 = vmatpush.msra.mxu0 %v107
    %461 = vmatpush.msra.mxu0 %v106
    %462 = vmatmul.f32.gmra.mxu0 %v444
    %v463 = vpop.f32.mrf.mxu0
    %v464 = vadd.f32 0.0, %v463
    %465 = vdwg.mxu0
    %v466 = vadd.f32 %v437, %v464
    %v467 = vxor.u32 %v466, 2147483648
    %v468 = vmul.f32 %v467, 1.442695
    %v469 = vpow.pop %v468
    %v470 = vadd.f32 %v469, 1.0
    %v471 = vrcp.pop %v470
    %v472 = vmul.f32 %v470, %v471
    %v473 = vsub.f32 1.0, %v472
    %v474 = vmul.f32 %v471, %v473
    %v475 = vadd.f32 %v471, %v474
    %vm476 = vweird.f32 %v470
    %vm477 = vweird.f32 %v471
    %vm478 = vmor %vm476, %vm477
    %v479 = vsel %vm478, %v471, %v475
    %v480 = vand.u32 2147483647, %v470
    %vm481 = vcmp.eq.f32.partialorder %v480, 8.507059e+37
    %v482 = vand.u32 %v470, 2147483648
    %v483 = vor.u32 1.1754944e-38, %v482
    %v484 = vsel %vm481, %v483, %v479
    %v485 = vmul.f32 1.0, %v484
    %v486 = vtanh.pop %v466
    %v487 = vmul.f32 %v485, 0.0
    %489 = vrot.lane.b32.xlu0 %v486, 32
    %v490 = vpop.permute.xlu0 %489
    %v492 = vmul.f32 %v485, %v490
    %494 = vrot.lane.b32.xlu0 %v492, 32
    %v495 = vpop.permute.xlu0 %494
    %v497 = vadd.f32 %v487, %v495
    %v498 = vtanh.pop %v497
    %500 = vrot.lane.b32.xlu0 %v498, 32
    %v501 = vpop.permute.xlu0 %500
    %v503 = vmul.f32 %v485, %v501
    %505 = vrot.lane.b32.xlu0 %v503, 64
    %v506 = vpop.permute.xlu0 %505
    %v507 = vsel %vm442, %v506, 0
    %509 = vmatpush.msra.mxu0 0.0
    %510 = vmatpush.msra.mxu0 0.0
    %511 = vmatpush.msra.mxu0 0.0
    %512 = vmatpush.msra.mxu0 0.0
    %513 = vmatpush.msra.mxu0 0.0
    %514 = vmatpush.msra.mxu0 0.0
    %515 = vmatpush.msra.mxu0 0.0
    %516 = vmatpush.msra.mxu0 0.0
    %517 = vmatpush.msra.mxu0 0.0
    %518 = vmatpush.msra.mxu0 0.0
    %519 = vmatpush.msra.mxu0 0.0
    %520 = vmatpush.msra.mxu0 0.0
    %521 = vmatpush.msra.mxu0 %v109
    %522 = vmatpush.msra.mxu0 %v108
    %523 = vmatpush.msra.mxu0 %v107
    %524 = vmatpush.msra.mxu0 %v106
    %525 = vmatmul.f32.gmra.mxu0 %v507
    %v526 = vpop.f32.mrf.mxu0
    %v527 = vadd.f32 0.0, %v526
    %528 = vdwg.mxu0
    %v530 = vrot.slane %v527, 6
    %v532 = vadd.f32 %v437, %v530
    %v533 = vxor.u32 %v532, 2147483648
    %v534 = vmul.f32 %v533, 1.442695
    %v535 = vpow.pop %v534
    %v536 = vadd.f32 %v535, 1.0
    %v537 = vrcp.pop %v536
    %v538 = vmul.f32 %v536, %v537
    %v539 = vsub.f32 1.0, %v538
    %v540 = vmul.f32 %v537, %v539
    %v541 = vadd.f32 %v537, %v540
    %vm542 = vweird.f32 %v536
    %vm543 = vweird.f32 %v537
    %vm544 = vmor %vm542, %vm543
    %v545 = vsel %vm544, %v537, %v541
    %v546 = vand.u32 2147483647, %v536
    %vm547 = vcmp.eq.f32.partialorder %v546, 8.507059e+37
    %v548 = vand.u32 %v536, 2147483648
    %v549 = vor.u32 1.1754944e-38, %v548
    %v550 = vsel %vm547, %v549, %v545
    %v551 = vmul.f32 1.0, %v550
    %v552 = vtanh.pop %v532
    %v554 = vrot.slane %v497, 6
    %v556 = vmul.f32 %v551, %v554
    %558 = vrot.lane.b32.xlu0 %v552, 32
    %v559 = vpop.permute.xlu0 %558
    %v561 = vmul.f32 %v551, %v559
    %563 = vrot.lane.b32.xlu0 %v561, 32
    %v564 = vpop.permute.xlu0 %563
    %v566 = vadd.f32 %v556, %v564
    %v567 = vtanh.pop %v566
    %569 = vrot.lane.b32.xlu0 %v567, 32
    %v570 = vpop.permute.xlu0 %569
    %v572 = vmul.f32 %v551, %v570
    %v574 = vrot.slane %v572, 2
    %575 = vrot.lane.b32.xlu0 %v574, 64
    %v576 = vpop.permute.xlu0 %575
    %v577 = vsel %vm442, %v576, 0
    %579 = vmatpush.msra.mxu0 0.0
    %580 = vmatpush.msra.mxu0 0.0
    %581 = vmatpush.msra.mxu0 0.0
    %582 = vmatpush.msra.mxu0 0.0
    %583 = vmatpush.msra.mxu0 0.0
    %584 = vmatpush.msra.mxu0 0.0
    %585 = vmatpush.msra.mxu0 0.0
    %586 = vmatpush.msra.mxu0 0.0
    %587 = vmatpush.msra.mxu0 0.0
    %588 = vmatpush.msra.mxu0 0.0
    %589 = vmatpush.msra.mxu0 0.0
    %590 = vmatpush.msra.mxu0 0.0
    %591 = vmatpush.msra.mxu0 %v109
    %592 = vmatpush.msra.mxu0 %v108
    %593 = vmatpush.msra.mxu0 %v107
    %594 = vmatpush.msra.mxu0 %v106
    %595 = vmatmul.f32.gmra.mxu0 %v577
    %v596 = vpop.f32.mrf.mxu0
    %v597 = vadd.f32 0.0, %v596
    %598 = vdwg.mxu0
    %v600 = vrot.slane %v597, 4
    %v602 = vadd.f32 %v437, %v600
    %v603 = vxor.u32 %v602, 2147483648
    %v604 = vmul.f32 %v603, 1.442695
    %v605 = vpow.pop %v604
    %v606 = vadd.f32 %v605, 1.0
    %v607 = vrcp.pop %v606
    %v608 = vmul.f32 %v606, %v607
    %v609 = vsub.f32 1.0, %v608
    %v610 = vmul.f32 %v607, %v609
    %v611 = vadd.f32 %v607, %v610
    %vm612 = vweird.f32 %v606
    %vm613 = vweird.f32 %v607
    %vm614 = vmor %vm612, %vm613
    %v615 = vsel %vm614, %v607, %v611
    %v616 = vand.u32 2147483647, %v606
    %vm617 = vcmp.eq.f32.partialorder %v616, 8.507059e+37
    %v618 = vand.u32 %v606, 2147483648
    %v619 = vor.u32 1.1754944e-38, %v618
    %v620 = vsel %vm617, %v619, %v615
    %v621 = vmul.f32 1.0, %v620
    %v622 = vtanh.pop %v602
    %v624 = vrot.slane %v566, 6
    %v626 = vmul.f32 %v621, %v624
    %628 = vrot.lane.b32.xlu0 %v622, 32
    %v629 = vpop.permute.xlu0 %628
    %v631 = vmul.f32 %v621, %v629
    %633 = vrot.lane.b32.xlu0 %v631, 32
    %v634 = vpop.permute.xlu0 %633
    %v636 = vadd.f32 %v626, %v634
    %v637 = vtanh.pop %v636
    %639 = vrot.lane.b32.xlu0 %v637, 32
    %v640 = vpop.permute.xlu0 %639
    %v642 = vmul.f32 %v621, %v640
    %v644 = vrot.slane %v642, 4
    %645 = vrot.lane.b32.xlu0 %v644, 64
    %v646 = vpop.permute.xlu0 %645
    %v647 = vsel %vm442, %v646, 0
    %649 = vmatpush.msra.mxu0 0.0
    %650 = vmatpush.msra.mxu0 0.0
    %651 = vmatpush.msra.mxu0 0.0
    %652 = vmatpush.msra.mxu0 0.0
    %653 = vmatpush.msra.mxu0 0.0
    %654 = vmatpush.msra.mxu0 0.0
    %655 = vmatpush.msra.mxu0 0.0
    %656 = vmatpush.msra.mxu0 0.0
    %657 = vmatpush.msra.mxu0 0.0
    %658 = vmatpush.msra.mxu0 0.0
    %659 = vmatpush.msra.mxu0 0.0
    %660 = vmatpush.msra.mxu0 0.0
    %661 = vmatpush.msra.mxu0 %v109
    %662 = vmatpush.msra.mxu0 %v108
    %663 = vmatpush.msra.mxu0 %v107
    %664 = vmatpush.msra.mxu0 %v106
    %665 = vmatmul.f32.gmra.mxu0 %v647
    %v666 = vpop.f32.mrf.mxu0
    %v667 = vadd.f32 0.0, %v666
    %668 = vdwg.mxu0
    %v670 = vrot.slane %v667, 2
    %v672 = vadd.f32 %v437, %v670
    %v673 = vxor.u32 %v672, 2147483648
    %v674 = vmul.f32 %v673, 1.442695
    %v675 = vpow.pop %v674
    %v676 = vadd.f32 %v675, 1.0
    %v677 = vrcp.pop %v676
    %v678 = vmul.f32 %v676, %v677
    %v679 = vsub.f32 1.0, %v678
    %v680 = vmul.f32 %v677, %v679
    %v681 = vadd.f32 %v677, %v680
    %vm682 = vweird.f32 %v676
    %vm683 = vweird.f32 %v677
    %vm684 = vmor %vm682, %vm683
    %v685 = vsel %vm684, %v677, %v681
    %v686 = vand.u32 2147483647, %v676
    %vm687 = vcmp.eq.f32.partialorder %v686, 8.507059e+37
    %v688 = vand.u32 %v676, 2147483648
    %v689 = vor.u32 1.1754944e-38, %v688
    %v690 = vsel %vm687, %v689, %v685
    %v691 = vmul.f32 1.0, %v690
    %v692 = vtanh.pop %v672
    %v694 = vrot.slane %v636, 6
    %v696 = vmul.f32 %v691, %v694
    %698 = vrot.lane.b32.xlu0 %v692, 32
    %v699 = vpop.permute.xlu0 %698
    %v701 = vmul.f32 %v691, %v699
    %703 = vrot.lane.b32.xlu0 %v701, 32
    %v704 = vpop.permute.xlu0 %703
    %v706 = vadd.f32 %v696, %v704
    %v707 = vtanh.pop %v706
    %709 = vrot.lane.b32.xlu0 %v707, 32
    %v710 = vpop.permute.xlu0 %709
    %v712 = vmul.f32 %v691, %v710
    %v714 = vrot.slane %v712, 6
    %715 = vrot.lane.b32.xlu0 %v714, 64
    %v716 = vpop.permute.xlu0 %715
    %v717 = vsel %vm442, %v716, 0
    %719 = vmatpush.msra.mxu0 0.0
    %720 = vmatpush.msra.mxu0 0.0
    %721 = vmatpush.msra.mxu0 0.0
    %722 = vmatpush.msra.mxu0 0.0
    %723 = vmatpush.msra.mxu0 0.0
    %724 = vmatpush.msra.mxu0 0.0
    %725 = vmatpush.msra.mxu0 0.0
    %726 = vmatpush.msra.mxu0 0.0
    %727 = vmatpush.msra.mxu0 0.0
    %728 = vmatpush.msra.mxu0 0.0
    %729 = vmatpush.msra.mxu0 0.0
    %730 = vmatpush.msra.mxu0 0.0
    %731 = vmatpush.msra.mxu0 %v109
    %732 = vmatpush.msra.mxu0 %v108
    %733 = vmatpush.msra.mxu0 %v107
    %734 = vmatpush.msra.mxu0 %v106
    %735 = vmatmul.f32.gmra.mxu0 %v717
    %v736 = vpop.f32.mrf.mxu0
    %v737 = vadd.f32 0.0, %v736
    %738 = vdwg.mxu0
    %v739 = vadd.f32 %v440, %v737
    %v740 = vxor.u32 %v739, 2147483648
    %v741 = vmul.f32 %v740, 1.442695
    %v742 = vpow.pop %v741
    %v743 = vadd.f32 %v742, 1.0
    %v744 = vrcp.pop %v743
    %v745 = vmul.f32 %v743, %v744
    %v746 = vsub.f32 1.0, %v745
    %v747 = vmul.f32 %v744, %v746
    %v748 = vadd.f32 %v744, %v747
    %vm749 = vweird.f32 %v743
    %vm750 = vweird.f32 %v744
    %vm751 = vmor %vm749, %vm750
    %v752 = vsel %vm751, %v744, %v748
    %v753 = vand.u32 2147483647, %v743
    %vm754 = vcmp.eq.f32.partialorder %v753, 8.507059e+37
    %v755 = vand.u32 %v743, 2147483648
    %v756 = vor.u32 1.1754944e-38, %v755
    %v757 = vsel %vm754, %v756, %v752
    %v758 = vmul.f32 1.0, %v757
    %v759 = vtanh.pop %v739
    %v761 = vrot.slane %v706, 6
    %v763 = vmul.f32 %v758, %v761
    %765 = vrot.lane.b32.xlu0 %v759, 32
    %v766 = vpop.permute.xlu0 %765
    %v768 = vmul.f32 %v758, %v766
    %770 = vrot.lane.b32.xlu0 %v768, 32
    %v771 = vpop.permute.xlu0 %770
    %v773 = vadd.f32 %v763, %v771
    %v774 = vtanh.pop %v773
    %776 = vrot.lane.b32.xlu0 %v774, 32
    %v777 = vpop.permute.xlu0 %776
    %v779 = vmul.f32 %v758, %v777
    %781 = vrot.lane.b32.xlu0 %v779, 64
    %v782 = vpop.permute.xlu0 %781
    %v783 = vsel %vm442, %v782, 0
    %785 = vmatpush.msra.mxu0 0.0
    %786 = vmatpush.msra.mxu0 0.0
    %787 = vmatpush.msra.mxu0 0.0
    %788 = vmatpush.msra.mxu0 0.0
    %789 = vmatpush.msra.mxu0 0.0
    %790 = vmatpush.msra.mxu0 0.0
    %791 = vmatpush.msra.mxu0 0.0
    %792 = vmatpush.msra.mxu0 0.0
    %793 = vmatpush.msra.mxu0 0.0
    %794 = vmatpush.msra.mxu0 0.0
    %795 = vmatpush.msra.mxu0 0.0
    %796 = vmatpush.msra.mxu0 0.0
    %797 = vmatpush.msra.mxu0 %v109
    %798 = vmatpush.msra.mxu0 %v108
    %799 = vmatpush.msra.mxu0 %v107
    %800 = vmatpush.msra.mxu0 %v106
    %801 = vmatmul.f32.gmra.mxu0 %v783
    %v802 = vpop.f32.mrf.mxu0
    %v803 = vadd.f32 0.0, %v802
    %804 = vdwg.mxu0
    %v806 = vrot.slane %v803, 6
    %v808 = vadd.f32 %v440, %v806
    %v809 = vxor.u32 %v808, 2147483648
    %v810 = vmul.f32 %v809, 1.442695
    %v811 = vpow.pop %v810
    %v812 = vadd.f32 %v811, 1.0
    %v813 = vrcp.pop %v812
    %v814 = vmul.f32 %v812, %v813
    %v815 = vsub.f32 1.0, %v814
    %v816 = vmul.f32 %v813, %v815
    %v817 = vadd.f32 %v813, %v816
    %vm818 = vweird.f32 %v812
    %vm819 = vweird.f32 %v813
    %vm820 = vmor %vm818, %vm819
    %v821 = vsel %vm820, %v813, %v817
    %v822 = vand.u32 2147483647, %v812
    %vm823 = vcmp.eq.f32.partialorder %v822, 8.507059e+37
    %v824 = vand.u32 %v812, 2147483648
    %v825 = vor.u32 1.1754944e-38, %v824
    %v826 = vsel %vm823, %v825, %v821
    %v827 = vmul.f32 1.0, %v826
    %v828 = vtanh.pop %v808
    %v830 = vrot.slane %v773, 6
    %v832 = vmul.f32 %v827, %v830
    %834 = vrot.lane.b32.xlu0 %v828, 32
    %v835 = vpop.permute.xlu0 %834
    %v837 = vmul.f32 %v827, %v835
    %839 = vrot.lane.b32.xlu0 %v837, 32
    %v840 = vpop.permute.xlu0 %839
    %v842 = vadd.f32 %v832, %v840
    %v843 = vtanh.pop %v842
    %845 = vrot.lane.b32.xlu0 %v843, 32
    %v846 = vpop.permute.xlu0 %845
    %v848 = vmul.f32 %v827, %v846
    %v850 = vrot.slane %v848, 2
    %851 = vrot.lane.b32.xlu0 %v850, 64
    %v852 = vpop.permute.xlu0 %851
    %v853 = vsel %vm442, %v852, 0
    %855 = vmatpush.msra.mxu0 0.0
    %856 = vmatpush.msra.mxu0 0.0
    %857 = vmatpush.msra.mxu0 0.0
    %858 = vmatpush.msra.mxu0 0.0
    %859 = vmatpush.msra.mxu0 0.0
    %860 = vmatpush.msra.mxu0 0.0
    %861 = vmatpush.msra.mxu0 0.0
    %862 = vmatpush.msra.mxu0 0.0
    %863 = vmatpush.msra.mxu0 0.0
    %864 = vmatpush.msra.mxu0 0.0
    %865 = vmatpush.msra.mxu0 0.0
    %866 = vmatpush.msra.mxu0 0.0
    %867 = vmatpush.msra.mxu0 %v109
    %868 = vmatpush.msra.mxu0 %v108
    %869 = vmatpush.msra.mxu0 %v107
    %870 = vmatpush.msra.mxu0 %v106
    %871 = vmatmul.f32.gmra.mxu0 %v853
    %v872 = vpop.f32.mrf.mxu0
    %v873 = vadd.f32 0.0, %v872
    %874 = vdwg.mxu0
    %v876 = vrot.slane %v873, 4
    %v878 = vadd.f32 %v440, %v876
    %v879 = vxor.u32 %v878, 2147483648
    %v880 = vmul.f32 %v879, 1.442695
    %v881 = vpow.pop %v880
    %v882 = vadd.f32 %v881, 1.0
    %v883 = vrcp.pop %v882
    %v884 = vmul.f32 %v882, %v883
    %v885 = vsub.f32 1.0, %v884
    %v886 = vmul.f32 %v883, %v885
    %v887 = vadd.f32 %v883, %v886
    %vm888 = vweird.f32 %v882
    %vm889 = vweird.f32 %v883
    %vm890 = vmor %vm888, %vm889
    %v891 = vsel %vm890, %v883, %v887
    %v892 = vand.u32 2147483647, %v882
    %vm893 = vcmp.eq.f32.partialorder %v892, 8.507059e+37
    %v894 = vand.u32 %v882, 2147483648
    %v895 = vor.u32 1.1754944e-38, %v894
    %v896 = vsel %vm893, %v895, %v891
    %v897 = vmul.f32 1.0, %v896
    %v898 = vtanh.pop %v878
    %v900 = vrot.slane %v842, 6
    %v902 = vmul.f32 %v897, %v900
    %904 = vrot.lane.b32.xlu0 %v898, 32
    %v905 = vpop.permute.xlu0 %904
    %v907 = vmul.f32 %v897, %v905
    %909 = vrot.lane.b32.xlu0 %v907, 32
    %v910 = vpop.permute.xlu0 %909
    %v912 = vadd.f32 %v902, %v910
    %v913 = vtanh.pop %v912
    %915 = vrot.lane.b32.xlu0 %v913, 32
    %v916 = vpop.permute.xlu0 %915
    %v918 = vmul.f32 %v897, %v916
    %v920 = vrot.slane %v918, 4
    %921 = vrot.lane.b32.xlu0 %v920, 64
    %v922 = vpop.permute.xlu0 %921
    %v923 = vsel %vm442, %v922, 0
    %925 = vmatpush.msra.mxu0 0.0
    %926 = vmatpush.msra.mxu0 0.0
    %927 = vmatpush.msra.mxu0 0.0
    %928 = vmatpush.msra.mxu0 0.0
    %929 = vmatpush.msra.mxu0 0.0
    %930 = vmatpush.msra.mxu0 0.0
    %931 = vmatpush.msra.mxu0 0.0
    %932 = vmatpush.msra.mxu0 0.0
    %933 = vmatpush.msra.mxu0 0.0
    %934 = vmatpush.msra.mxu0 0.0
    %935 = vmatpush.msra.mxu0 0.0
    %936 = vmatpush.msra.mxu0 0.0
    %937 = vmatpush.msra.mxu0 %v109
    %938 = vmatpush.msra.mxu0 %v108
    %939 = vmatpush.msra.mxu0 %v107
    %940 = vmatpush.msra.mxu0 %v106
    %941 = vmatmul.f32.gmra.mxu0 %v923
    %v942 = vpop.f32.mrf.mxu0
    %v943 = vadd.f32 0.0, %v942
    %944 = vdwg.mxu0
    %v946 = vrot.slane %v943, 2
    %v948 = vadd.f32 %v440, %v946
    %v949 = vxor.u32 %v948, 2147483648
    %v950 = vmul.f32 %v949, 1.442695
    %v951 = vpow.pop %v950
    %v952 = vadd.f32 %v951, 1.0
    %v953 = vrcp.pop %v952
    %v954 = vmul.f32 %v952, %v953
    %v955 = vsub.f32 1.0, %v954
    %v956 = vmul.f32 %v953, %v955
    %v957 = vadd.f32 %v953, %v956
    %vm958 = vweird.f32 %v952
    %vm959 = vweird.f32 %v953
    %vm960 = vmor %vm958, %vm959
    %v961 = vsel %vm960, %v953, %v957
    %v962 = vand.u32 2147483647, %v952
    %vm963 = vcmp.eq.f32.partialorder %v962, 8.507059e+37
    %v964 = vand.u32 %v952, 2147483648
    %v965 = vor.u32 1.1754944e-38, %v964
    %v966 = vsel %vm963, %v965, %v961
    %v967 = vmul.f32 1.0, %v966
    %v968 = vtanh.pop %v948
    %v970 = vrot.slane %v912, 6
    %v972 = vmul.f32 %v967, %v970
    %974 = vrot.lane.b32.xlu0 %v968, 32
    %v975 = vpop.permute.xlu0 %974
    %v977 = vmul.f32 %v967, %v975
    %979 = vrot.lane.b32.xlu0 %v977, 32
    %v980 = vpop.permute.xlu0 %979
    %v982 = vadd.f32 %v972, %v980
    %v983 = vtanh.pop %v982
    %985 = vrot.lane.b32.xlu0 %v983, 32
    %v986 = vpop.permute.xlu0 %985
    %v988 = vmul.f32 %v967, %v986
    %v990 = vrot.slane %v988, 6
    %991 = vrot.lane.b32.xlu0 %v990, 64
    %v992 = vpop.permute.xlu0 %991
    %v993 = vsel %vm442, %v992, 0
    %995 = vmatpush.msra.mxu0 0.0
    %996 = vmatpush.msra.mxu0 0.0
    %997 = vmatpush.msra.mxu0 0.0
    %998 = vmatpush.msra.mxu0 0.0
    %999 = vmatpush.msra.mxu0 0.0
    %1000 = vmatpush.msra.mxu0 0.0
    %1001 = vmatpush.msra.mxu0 0.0
    %1002 = vmatpush.msra.mxu0 0.0
    %1003 = vmatpush.msra.mxu0 0.0
    %1004 = vmatpush.msra.mxu0 0.0
    %1005 = vmatpush.msra.mxu0 0.0
    %1006 = vmatpush.msra.mxu0 0.0
    %1007 = vmatpush.msra.mxu0 %v113
    %1008 = vmatpush.msra.mxu0 %v112
    %1009 = vmatpush.msra.mxu0 %v111
    %1010 = vmatpush.msra.mxu0 %v110
    %1011 = vmatmul.f32.gmra.mxu0 %v993
    %v1012 = vpop.f32.mrf.mxu0
    %v1013 = vadd.f32 %v156, %v1012
    %1014 = vdwg.mxu0
    %1015 = vst [vmem:[#allocation7] sm:$0x3] %v1013
    // Predicated region
    $region26: #{lstm_model_forward.1} parent=1 // pred_check
      _
    $region27: #{lstm_model_forward.1} parent=1 // pred_check_branch
      %1017 = sbr.rel (0) target = $region29
    $region28: #{lstm_model_forward.1} parent=1 // pred_region
      %1019 = vsyncadd [#allocation4], 0
      %s1021 = sshll.u32 [#allocation7], 4
      %s1022 = int_to_ptr.vmem [resolvable:$true] %s1021
      %s1023 = sshll.u32 %s4, 4
      %s1024 = int_to_ptr.hbm [resolvable:$true] %s1023
      %1026 = dma.vmem_to_hbm [thread:$0]  %s1022, 32, %s1024, [#allocation4]
    $region29: #{lstm_model_forward.1} parent=1 // pred_fallthru
      _
    // Predicated region
    $region30: #{lstm_model_forward.1} parent=1 // pred_check
      _
    $region31: #{lstm_model_forward.1} parent=1 // pred_check_branch
      %1028 = sbr.rel (0) target = $region33
    $region32: #{lstm_model_forward.1} parent=1 // pred_region
      %1030 = dma.done [#allocation4], 32
    $region33: #{lstm_model_forward.1} parent=1 // pred_fallthru
      _
    %1031 = vsyncpa [#allocation3], 1
    %1032 = vsyncpa [#allocation6], 1
    %1033 = vsyncpa [#allocation4], 1

</llo_original>
